<compile_context>
chip_gen: v6e
topology: v6e:2x2x1
jax: 0.10.0
libtpu: 0.0.40
codegen_flags: <defaults>
</compile_context>

<pallas_src>
import functools

import jax
import jax.numpy as jnp
from jax.experimental import pallas as pl
from jax.experimental.pallas import tpu as pltpu


# ----------------------------- Pallas kernel ------------------------------- #

def _fused_mesh_conv_kernel(*refs, n_layers, n_faces, fuse_groups):
    """Fused MultiMeshConv forward.

    refs = [gfmm, x0, w0, b0, (wsg_i, b_i) for i=1..n_layers-1, out]
      gfmm : (1, 3F) i32 (fuse_groups) or (3, F) i32   neighbour face indices
      x0   : (C0, 3F) f32 (fuse_groups) or (3, C0, F) f32  first-layer input
      w0   : (C1, C0) f32, b0 : (C1, 1) f32
      wsg_i: (2*Cout, Cin) f32   rows [0:Cout] = gather half, [Cout:] = self half
      b_i  : (Cout, 1) f32
      out  : (C_last, F) f32
    """
    gfmm_ref, x0_ref = refs[0], refs[1]
    out_ref = refs[-1]
    pref = refs[2:-1]

    f32 = jnp.float32
    F = n_faces

    def norm_lrelu(h):
        # InstanceNorm1d (affine=False, biased var, eps=1e-5) + LeakyReLU(0.2).
        inv_f = 1.0 / F
        mean = jnp.sum(h, axis=-1, keepdims=True) * inv_f
        ex2 = jnp.sum(h * h, axis=-1, keepdims=True) * inv_f
        var = ex2 - mean * mean
        hn = (h - mean) * jax.lax.rsqrt(var + 1e-5)
        return jnp.where(hn >= 0.0, hn, 0.2 * hn)

    gf = gfmm_ref[...]

    # One-hot gather matrices, built once and reused by every non-first layer:
    # (t @ onehot)[o, l] == t[o, gfmm_flat[l]].  The face gather commutes with
    # the channel contraction, so gathering the (Cout, F) matmul output is
    # equivalent to gathering the (Cin, 3, F) input and much cheaper.
    if fuse_groups:
        src = jax.lax.broadcasted_iota(jnp.int32, (F, 3 * F), 0)
        onehot_all = (gf == src).astype(f32)                         # (F, 3F)
    else:
        src = jax.lax.broadcasted_iota(jnp.int32, (F, F), 0)
        onehot = [(gf[g:g + 1, :] == src).astype(f32) for g in range(3)]

    def max3_lanes(y):
        # y: (C, 3F), lane-aligned slices when F % 128 == 0.
        return jnp.maximum(jnp.maximum(y[:, :F], y[:, F:2 * F]), y[:, 2 * F:])

    # ---- layer 0: first SingleMeshConv (no gather; 3 face-vertex groups) ----
    w0 = pref[0][...]                                                # (C1, C0)
    b0 = pref[1][...]                                                # (C1, 1)
    if fuse_groups:
        y0 = jnp.dot(w0, x0_ref[...], preferred_element_type=f32)    # (C1, 3F)
        m = max3_lanes(y0)
    else:
        m = None
        for g in range(3):
            yg = jnp.dot(w0, x0_ref[g], preferred_element_type=f32)  # (C1, F)
            m = yg if m is None else jnp.maximum(m, yg)
    h = m + b0                                  # bias added once, after the max

    # ---- layers 1..n-1: gather branch (max over 3 groups) + self branch ----
    for li in range(1, n_layers):
        base = 2 + 2 * (li - 1)
        wsg = pref[base + 0][...]                                    # (2Cout, Cin)
        b = pref[base + 1][...]                                      # (Cout, 1)
        cout = wsg.shape[0] // 2

        # Previous layer is never the last one here, so it always gets norm+act.
        h = norm_lrelu(h)

        y2 = jnp.dot(wsg, h, preferred_element_type=f32)             # (2Cout, F)
        t = y2[:cout]                                                # gather half
        y_self = y2[cout:]                                           # self half

        if fuse_groups:
            yall = jnp.dot(t, onehot_all, preferred_element_type=f32)  # (Cout, 3F)
            m = max3_lanes(yall)
        else:
            m = None
            for g in range(3):
                yg = jnp.dot(t, onehot[g], preferred_element_type=f32)
                m = yg if m is None else jnp.maximum(m, yg)
        h = m + y_self + b                   # group-independent terms added once

    out_ref[...] = h.astype(out_ref.dtype)


# ------------------------------ JAX wrapper -------------------------------- #

def _full_spec(a):
    nd = a.ndim
    return pl.BlockSpec(a.shape, lambda i, _nd=nd: (0,) * _nd)


def multi_mesh_conv(x, gfmm, params):
    """Fused forward.  x: (1, 3*C0, F) f32; gfmm: (3, F) int32;
    params: list of (w, b) per layer in PyTorch Conv1d layout."""
    n_faces = x.shape[-1]
    n_layers = len(params)
    c0 = params[0][0].shape[1]
    cout_last = params[-1][0].shape[0]
    fuse_groups = (n_faces % 128 == 0)

    # Layout glue (free views, done once in the wrapper):
    #   the PyTorch view(1,3,C0,F).permute(0,2,1,3) is replaced by either a
    #   lane-concatenated (C0, 3F) slab (fuse_groups) or an explicit group
    #   axis (3, C0, F).
    if fuse_groups:
        x0 = x[0].reshape(3, c0, n_faces).transpose(1, 0, 2).reshape(c0, 3 * n_faces)
        gf_arg = gfmm.astype(jnp.int32).reshape(1, 3 * n_faces)
    else:
        x0 = x[0].reshape(3, c0, n_faces)
        gf_arg = gfmm.astype(jnp.int32)

    flat_params = []
    for li, (w, b) in enumerate(params):
        cout = w.shape[0]
        if li == 0:
            flat_params += [w, b.reshape(cout, 1)]
        else:
            cin = w.shape[1] // 2
            # Conv1d weight columns: [gather half | self(broadcast) half],
            # stacked row-wise so the kernel does ONE channel matmul per layer.
            wsg = jnp.concatenate([w[:, :cin], w[:, cin:]], axis=0)
            flat_params += [wsg, b.reshape(cout, 1)]

    args = [gf_arg, x0] + flat_params

    # Advisory cost estimate (kernel is VPU/HBM-bound at these widths).
    flops = 2 * params[0][0].shape[0] * c0 * 3 * n_faces
    transcendentals = 0
    for li, (w, _) in enumerate(params):
        cout = w.shape[0]
        if li > 0:
            cin = w.shape[1] // 2
            flops += 2 * (2 * cout) * cin * n_faces            # stacked matmul
            flops += 2 * cout * n_faces * 3 * n_faces          # one-hot gather
        if li != n_layers - 1:
            transcendentals += cout                            # rsqrt / channel
    bytes_accessed = sum(int(a.size) * a.dtype.itemsize for a in args)
    bytes_accessed += cout_last * n_faces * 4

    kernel = functools.partial(
        _fused_mesh_conv_kernel,
        n_layers=n_layers, n_faces=n_faces, fuse_groups=fuse_groups)

    out = pl.pallas_call(
        kernel,
        out_shape=jax.ShapeDtypeStruct((cout_last, n_faces), jnp.float32),
        grid=(1,),
        in_specs=[_full_spec(a) for a in args],
        out_specs=pl.BlockSpec((cout_last, n_faces), lambda i: (0, 0)),
        compiler_params=pltpu.CompilerParams(
            dimension_semantics=("arbitrary",),
            vmem_limit_bytes=32 * 1024 * 1024),
        cost_estimate=pl.CostEstimate(
            flops=flops,
            transcendentals=transcendentals,
            bytes_accessed=bytes_accessed),
    )(*args)
    return out[None]  # (1, C_last, F), matches the PyTorch module output


# --------------------------- Pure-JAX reference ----------------------------- #

def _single_mesh_conv_ref(x, gfmm, w, b, first):
    n_faces = x.shape[-1]
    if not first:
        x_a = x[:, :, gfmm]                                      # (1, C, 3, F)
        x_b = jnp.broadcast_to(x[:, :, None, :], x_a.shape)
        xx = jnp.concatenate([x_a, x_b], axis=1)
    else:
        xx = x.reshape(1, 3, -1, n_faces).transpose(0, 2, 1, 3)
    xx = xx.reshape(1, -1, n_faces * 3)
    y = jnp.einsum('oc,bcl->bol', w, xx) + b[None, :, None]
    y = y.reshape(1, -1, 3, n_faces)
    return y.max(axis=2)


def multi_mesh_conv_ref(x, gfmm, params):
    n_layers = len(params)
    h = x
    for li, (w, b) in enumerate(params):
        h = _single_mesh_conv_ref(h, gfmm, w, b, first=(li == 0))
        if li != n_layers - 1:
            mean = h.mean(axis=-1, keepdims=True)
            var = ((h - mean) ** 2).mean(axis=-1, keepdims=True)
            h = (h - mean) / jnp.sqrt(var + 1e-5)
            h = jnp.where(h >= 0, h, 0.2 * h)
    return h


# ------------------------------- Param init -------------------------------- #

def init_params(key, number_features):
    """Deterministic Conv1d-style init (uniform +/- 1/sqrt(fan_in))."""
    params = []
    for i in range(len(number_features) - 1):
        cin = number_features[i] if i == 0 else number_features[i] * 2
        cout = number_features[i + 1]
        key, kw, kb = jax.random.split(key, 3)
        bound = 1.0 / (cin ** 0.5)
        w = jax.random.uniform(kw, (cout, cin), jnp.float32, -bound, bound)
        b = jax.random.uniform(kb, (cout,), jnp.float32, -bound, bound)
        params.append((w, b))
    return params


# ---------------------------------- main ------------------------------------ #

if __name__ == "__main__":
    key = jax.random.PRNGKey(0)
    number_features = [3, 16, 32, 16]   # layers: 3->16 (first), 32->32, 64->16
    n_faces = 128

    k_x, k_g, k_p = jax.random.split(key, 3)
    # First layer expects 3 * in_channels = 9 channels (xyz of 3 face vertices).
    x = jax.random.normal(k_x, (1, 3 * number_features[0], n_faces), jnp.float32)
    gfmm = jax.random.randint(k_g, (3, n_faces), 0, n_faces, dtype=jnp.int32)
    params = init_params(k_p, number_features)

    out = multi_mesh_conv(x, gfmm, params)
    out = jax.block_until_ready(out)

    ref = multi_mesh_conv_ref(x, gfmm, params)
    assert out.shape == (1, number_features[-1], n_faces), out.shape
    assert bool(jnp.all(jnp.isfinite(out)))
    assert bool(jnp.allclose(out, ref, atol=2e-4, rtol=2e-4))

    print("KERNEL_OK")
</pallas_src>

<mosaic_0001>
module attributes {stable_mosaic.version = 11 : i64} {
  func.func @_fused_mesh_conv_kernel(%arg0: i32, %arg1: memref<1x384xi32, #tpu.memory_space<vmem>>, %arg2: memref<3x384xf32, #tpu.memory_space<vmem>>, %arg3: memref<16x3xf32, #tpu.memory_space<vmem>>, %arg4: memref<16x1xf32, #tpu.memory_space<vmem>>, %arg5: memref<64x16xf32, #tpu.memory_space<vmem>>, %arg6: memref<32x1xf32, #tpu.memory_space<vmem>>, %arg7: memref<32x32xf32, #tpu.memory_space<vmem>>, %arg8: memref<16x1xf32, #tpu.memory_space<vmem>>, %arg9: memref<16x128xf32, #tpu.memory_space<vmem>>) attributes {dimension_semantics = [#tpu.dimension_semantics<arbitrary>], iteration_bounds = array<i64: 1>, scalar_prefetch = 0 : i64, scratch_operands = 0 : i64, tpu.core_type = #tpu.core_type<tc>, window_params = [{pipeline_mode = #tpu.pipeline_mode<synchronous>, transform_indices = @transform_0, window_bounds = array<i64: 1, 384>}, {pipeline_mode = #tpu.pipeline_mode<synchronous>, transform_indices = @transform_1, window_bounds = array<i64: 3, 384>}, {pipeline_mode = #tpu.pipeline_mode<synchronous>, transform_indices = @transform_2, window_bounds = array<i64: 16, 3>}, {pipeline_mode = #tpu.pipeline_mode<synchronous>, transform_indices = @transform_3, window_bounds = array<i64: 16, 1>}, {pipeline_mode = #tpu.pipeline_mode<synchronous>, transform_indices = @transform_4, window_bounds = array<i64: 64, 16>}, {pipeline_mode = #tpu.pipeline_mode<synchronous>, transform_indices = @transform_5, window_bounds = array<i64: 32, 1>}, {pipeline_mode = #tpu.pipeline_mode<synchronous>, transform_indices = @transform_6, window_bounds = array<i64: 32, 32>}, {pipeline_mode = #tpu.pipeline_mode<synchronous>, transform_indices = @transform_7, window_bounds = array<i64: 16, 1>}, {pipeline_mode = #tpu.pipeline_mode<synchronous>, transform_indices = @transform_8, window_bounds = array<i64: 16, 128>}]} {
    %c0 = arith.constant 0 : index
    %c0_0 = arith.constant 0 : index
    %0 = vector.load %arg1[%c0, %c0_0] : memref<1x384xi32, #tpu.memory_space<vmem>>, vector<1x384xi32>
    %1 = tpu.iota {dimensions = array<i32: 0>} : vector<128x384xi32>
    %2 = vector.broadcast %0 : vector<1x384xi32> to vector<128x384xi32>
    %3 = arith.cmpi eq, %2, %1 : vector<128x384xi32>
    %4 = arith.extui %3 : vector<128x384xi1> to vector<128x384xi32>
    %5 = arith.sitofp %4 : vector<128x384xi32> to vector<128x384xf32>
    %c0_1 = arith.constant 0 : index
    %c0_2 = arith.constant 0 : index
    %6 = vector.load %arg3[%c0_1, %c0_2] : memref<16x3xf32, #tpu.memory_space<vmem>>, vector<16x3xf32>
    %c0_3 = arith.constant 0 : index
    %c0_4 = arith.constant 0 : index
    %7 = vector.load %arg4[%c0_3, %c0_4] : memref<16x1xf32, #tpu.memory_space<vmem>>, vector<16x1xf32>
    %c0_5 = arith.constant 0 : index
    %c0_6 = arith.constant 0 : index
    %8 = vector.load %arg2[%c0_5, %c0_6] : memref<3x384xf32, #tpu.memory_space<vmem>>, vector<3x384xf32>
    %cst = arith.constant dense<0.000000e+00> : vector<16x384xf32>
    %9 = tpu.matmul %6, %8, %cst {dimension_numbers = #tpu.dot_dimension_numbers<[1], [0], [0], [1], [0, 0, 1, 1], [], []>} : vector<16x3xf32>, vector<3x384xf32>, vector<16x384xf32> -> vector<16x384xf32>
    %10 = vector.extract_strided_slice %9 {offsets = [0, 0], sizes = [16, 128], strides = [1, 1]} : vector<16x384xf32> to vector<16x128xf32>
    %11 = vector.extract_strided_slice %9 {offsets = [0, 128], sizes = [16, 128], strides = [1, 1]} : vector<16x384xf32> to vector<16x128xf32>
    %12 = arith.maximumf %10, %11 : vector<16x128xf32>
    %13 = vector.extract_strided_slice %9 {offsets = [0, 256], sizes = [16, 128], strides = [1, 1]} : vector<16x384xf32> to vector<16x128xf32>
    %14 = arith.maximumf %12, %13 : vector<16x128xf32>
    %15 = vector.broadcast %7 : vector<16x1xf32> to vector<16x128xf32>
    %16 = arith.addf %14, %15 : vector<16x128xf32>
    %c0_7 = arith.constant 0 : index
    %c0_8 = arith.constant 0 : index
    %17 = vector.load %arg5[%c0_7, %c0_8] : memref<64x16xf32, #tpu.memory_space<vmem>>, vector<64x16xf32>
    %c0_9 = arith.constant 0 : index
    %c0_10 = arith.constant 0 : index
    %18 = vector.load %arg6[%c0_9, %c0_10] : memref<32x1xf32, #tpu.memory_space<vmem>>, vector<32x1xf32>
    %cst_11 = arith.constant dense<0.000000e+00> : vector<16xf32>
    %19 = vector.multi_reduction <add>, %16, %cst_11 [1] : vector<16x128xf32> to vector<16xf32>
    %20 = vector.shape_cast %19 : vector<16xf32> to vector<16x1xf32>
    %cst_12 = arith.constant 7.812500e-03 : f32
    %21 = vector.broadcast %cst_12 : f32 to vector<16x1xf32>
    %22 = arith.mulf %20, %21 : vector<16x1xf32>
    %23 = arith.mulf %16, %16 : vector<16x128xf32>
    %cst_13 = arith.constant dense<0.000000e+00> : vector<16xf32>
    %24 = vector.multi_reduction <add>, %23, %cst_13 [1] : vector<16x128xf32> to vector<16xf32>
    %25 = vector.shape_cast %24 : vector<16xf32> to vector<16x1xf32>
    %cst_14 = arith.constant 7.812500e-03 : f32
    %26 = vector.broadcast %cst_14 : f32 to vector<16x1xf32>
    %27 = arith.mulf %25, %26 : vector<16x1xf32>
    %28 = arith.mulf %22, %22 : vector<16x1xf32>
    %29 = arith.subf %27, %28 : vector<16x1xf32>
    %30 = vector.broadcast %22 : vector<16x1xf32> to vector<16x128xf32>
    %31 = arith.subf %16, %30 : vector<16x128xf32>
    %cst_15 = arith.constant 9.99999974E-6 : f32
    %32 = vector.broadcast %cst_15 : f32 to vector<16x1xf32>
    %33 = arith.addf %29, %32 : vector<16x1xf32>
    %34 = math.rsqrt %33 : vector<16x1xf32>
    %35 = vector.broadcast %34 : vector<16x1xf32> to vector<16x128xf32>
    %36 = arith.mulf %31, %35 : vector<16x128xf32>
    %cst_16 = arith.constant 0.000000e+00 : f32
    %37 = vector.broadcast %cst_16 : f32 to vector<16x128xf32>
    %38 = arith.cmpf oge, %36, %37 : vector<16x128xf32>
    %cst_17 = arith.constant 2.000000e-01 : f32
    %39 = vector.broadcast %cst_17 : f32 to vector<16x128xf32>
    %40 = arith.mulf %39, %36 : vector<16x128xf32>
    %41 = arith.select %38, %36, %40 : vector<16x128xi1>, vector<16x128xf32>
    %cst_18 = arith.constant dense<0.000000e+00> : vector<64x128xf32>
    %42 = tpu.matmul %17, %41, %cst_18 {dimension_numbers = #tpu.dot_dimension_numbers<[1], [0], [0], [1], [0, 0, 1, 1], [], []>} : vector<64x16xf32>, vector<16x128xf32>, vector<64x128xf32> -> vector<64x128xf32>
    %43 = vector.extract_strided_slice %42 {offsets = [0, 0], sizes = [32, 128], strides = [1, 1]} : vector<64x128xf32> to vector<32x128xf32>
    %44 = vector.extract_strided_slice %42 {offsets = [32, 0], sizes = [32, 128], strides = [1, 1]} : vector<64x128xf32> to vector<32x128xf32>
    %cst_19 = arith.constant dense<0.000000e+00> : vector<32x384xf32>
    %45 = tpu.matmul %43, %5, %cst_19 {dimension_numbers = #tpu.dot_dimension_numbers<[1], [0], [0], [1], [0, 0, 1, 1], [], []>} : vector<32x128xf32>, vector<128x384xf32>, vector<32x384xf32> -> vector<32x384xf32>
    %46 = vector.extract_strided_slice %45 {offsets = [0, 0], sizes = [32, 128], strides = [1, 1]} : vector<32x384xf32> to vector<32x128xf32>
    %47 = vector.extract_strided_slice %45 {offsets = [0, 128], sizes = [32, 128], strides = [1, 1]} : vector<32x384xf32> to vector<32x128xf32>
    %48 = arith.maximumf %46, %47 : vector<32x128xf32>
    %49 = vector.extract_strided_slice %45 {offsets = [0, 256], sizes = [32, 128], strides = [1, 1]} : vector<32x384xf32> to vector<32x128xf32>
    %50 = arith.maximumf %48, %49 : vector<32x128xf32>
    %51 = arith.addf %50, %44 : vector<32x128xf32>
    %52 = vector.broadcast %18 : vector<32x1xf32> to vector<32x128xf32>
    %53 = arith.addf %51, %52 : vector<32x128xf32>
    %c0_20 = arith.constant 0 : index
    %c0_21 = arith.constant 0 : index
    %54 = vector.load %arg7[%c0_20, %c0_21] : memref<32x32xf32, #tpu.memory_space<vmem>>, vector<32x32xf32>
    %c0_22 = arith.constant 0 : index
    %c0_23 = arith.constant 0 : index
    %55 = vector.load %arg8[%c0_22, %c0_23] : memref<16x1xf32, #tpu.memory_space<vmem>>, vector<16x1xf32>
    %cst_24 = arith.constant dense<0.000000e+00> : vector<32xf32>
    %56 = vector.multi_reduction <add>, %53, %cst_24 [1] : vector<32x128xf32> to vector<32xf32>
    %57 = vector.shape_cast %56 : vector<32xf32> to vector<32x1xf32>
    %cst_25 = arith.constant 7.812500e-03 : f32
    %58 = vector.broadcast %cst_25 : f32 to vector<32x1xf32>
    %59 = arith.mulf %57, %58 : vector<32x1xf32>
    %60 = arith.mulf %53, %53 : vector<32x128xf32>
    %cst_26 = arith.constant dense<0.000000e+00> : vector<32xf32>
    %61 = vector.multi_reduction <add>, %60, %cst_26 [1] : vector<32x128xf32> to vector<32xf32>
    %62 = vector.shape_cast %61 : vector<32xf32> to vector<32x1xf32>
    %cst_27 = arith.constant 7.812500e-03 : f32
    %63 = vector.broadcast %cst_27 : f32 to vector<32x1xf32>
    %64 = arith.mulf %62, %63 : vector<32x1xf32>
    %65 = arith.mulf %59, %59 : vector<32x1xf32>
    %66 = arith.subf %64, %65 : vector<32x1xf32>
    %67 = vector.broadcast %59 : vector<32x1xf32> to vector<32x128xf32>
    %68 = arith.subf %53, %67 : vector<32x128xf32>
    %cst_28 = arith.constant 9.99999974E-6 : f32
    %69 = vector.broadcast %cst_28 : f32 to vector<32x1xf32>
    %70 = arith.addf %66, %69 : vector<32x1xf32>
    %71 = math.rsqrt %70 : vector<32x1xf32>
    %72 = vector.broadcast %71 : vector<32x1xf32> to vector<32x128xf32>
    %73 = arith.mulf %68, %72 : vector<32x128xf32>
    %cst_29 = arith.constant 0.000000e+00 : f32
    %74 = vector.broadcast %cst_29 : f32 to vector<32x128xf32>
    %75 = arith.cmpf oge, %73, %74 : vector<32x128xf32>
    %cst_30 = arith.constant 2.000000e-01 : f32
    %76 = vector.broadcast %cst_30 : f32 to vector<32x128xf32>
    %77 = arith.mulf %76, %73 : vector<32x128xf32>
    %78 = arith.select %75, %73, %77 : vector<32x128xi1>, vector<32x128xf32>
    %cst_31 = arith.constant dense<0.000000e+00> : vector<32x128xf32>
    %79 = tpu.matmul %54, %78, %cst_31 {dimension_numbers = #tpu.dot_dimension_numbers<[1], [0], [0], [1], [0, 0, 1, 1], [], []>} : vector<32x32xf32>, vector<32x128xf32>, vector<32x128xf32> -> vector<32x128xf32>
    %80 = vector.extract_strided_slice %79 {offsets = [0, 0], sizes = [16, 128], strides = [1, 1]} : vector<32x128xf32> to vector<16x128xf32>
    %81 = vector.extract_strided_slice %79 {offsets = [16, 0], sizes = [16, 128], strides = [1, 1]} : vector<32x128xf32> to vector<16x128xf32>
    %cst_32 = arith.constant dense<0.000000e+00> : vector<16x384xf32>
    %82 = tpu.matmul %80, %5, %cst_32 {dimension_numbers = #tpu.dot_dimension_numbers<[1], [0], [0], [1], [0, 0, 1, 1], [], []>} : vector<16x128xf32>, vector<128x384xf32>, vector<16x384xf32> -> vector<16x384xf32>
    %83 = vector.extract_strided_slice %82 {offsets = [0, 0], sizes = [16, 128], strides = [1, 1]} : vector<16x384xf32> to vector<16x128xf32>
    %84 = vector.extract_strided_slice %82 {offsets = [0, 128], sizes = [16, 128], strides = [1, 1]} : vector<16x384xf32> to vector<16x128xf32>
    %85 = arith.maximumf %83, %84 : vector<16x128xf32>
    %86 = vector.extract_strided_slice %82 {offsets = [0, 256], sizes = [16, 128], strides = [1, 1]} : vector<16x384xf32> to vector<16x128xf32>
    %87 = arith.maximumf %85, %86 : vector<16x128xf32>
    %88 = arith.addf %87, %81 : vector<16x128xf32>
    %89 = vector.broadcast %55 : vector<16x1xf32> to vector<16x128xf32>
    %90 = arith.addf %88, %89 : vector<16x128xf32>
    %c0_33 = arith.constant 0 : index
    %c0_34 = arith.constant 0 : index
    %91 = vector.load %arg9[%c0_33, %c0_34] : memref<16x128xf32, #tpu.memory_space<vmem>>, vector<16x128xf32>
    tpu.vector_store %arg9[%c0_33, %c0_34], %90 {strides = array<i32>} : memref<16x128xf32, #tpu.memory_space<vmem>>, vector<16x128xf32>,
    return
  }
  func.func @transform_0(%arg0: i32) -> (i32, i32) {
    %c0_i32 = arith.constant 0 : i32
    %c0_i32_0 = arith.constant 0 : i32
    %c0_i32_1 = arith.constant 0 : i32
    return %c0_i32, %c0_i32_0 : i32, i32
  }
  func.func @transform_1(%arg0: i32) -> (i32, i32) {
    %c0_i32 = arith.constant 0 : i32
    %c0_i32_0 = arith.constant 0 : i32
    %c0_i32_1 = arith.constant 0 : i32
    return %c0_i32, %c0_i32_0 : i32, i32
  }
  func.func @transform_2(%arg0: i32) -> (i32, i32) {
    %c0_i32 = arith.constant 0 : i32
    %c0_i32_0 = arith.constant 0 : i32
    %c0_i32_1 = arith.constant 0 : i32
    return %c0_i32, %c0_i32_0 : i32, i32
  }
  func.func @transform_3(%arg0: i32) -> (i32, i32) {
    %c0_i32 = arith.constant 0 : i32
    %c0_i32_0 = arith.constant 0 : i32
    %c0_i32_1 = arith.constant 0 : i32
    return %c0_i32, %c0_i32_0 : i32, i32
  }
  func.func @transform_4(%arg0: i32) -> (i32, i32) {
    %c0_i32 = arith.constant 0 : i32
    %c0_i32_0 = arith.constant 0 : i32
    %c0_i32_1 = arith.constant 0 : i32
    return %c0_i32, %c0_i32_0 : i32, i32
  }
  func.func @transform_5(%arg0: i32) -> (i32, i32) {
    %c0_i32 = arith.constant 0 : i32
    %c0_i32_0 = arith.constant 0 : i32
    %c0_i32_1 = arith.constant 0 : i32
    return %c0_i32, %c0_i32_0 : i32, i32
  }
  func.func @transform_6(%arg0: i32) -> (i32, i32) {
    %c0_i32 = arith.constant 0 : i32
    %c0_i32_0 = arith.constant 0 : i32
    %c0_i32_1 = arith.constant 0 : i32
    return %c0_i32, %c0_i32_0 : i32, i32
  }
  func.func @transform_7(%arg0: i32) -> (i32, i32) {
    %c0_i32 = arith.constant 0 : i32
    %c0_i32_0 = arith.constant 0 : i32
    %c0_i32_1 = arith.constant 0 : i32
    return %c0_i32, %c0_i32_0 : i32, i32
  }
  func.func @transform_8(%arg0: i32) -> (i32, i32) {
    %c0_i32 = arith.constant 0 : i32
    %c0_i32_0 = arith.constant 0 : i32
    %c0_i32_1 = arith.constant 0 : i32
    return %c0_i32, %c0_i32_0 : i32, i32
  }
}

</mosaic_0001>

<llo_original>
// kernel: tpu_custom_call.1
$region0: #{tpu_custom_call.1}
  #allocation0 [shape = 'u32[]', space=smem, size = 0x4, offset = 0x4, fixed_abs, tag = 'smem constant byte address 0x4 - core index']
  #allocation1 [shape = 'u32[144,128]{1,0:T(1,128)}', space=vmem, size = 0x12000, scoped, tag = 'internal scratch']
  %s0 = inlined_call_operand.vmem [shape: s32[1,384], index: 0, kind: input, shape index: {}]
  %s1 = inlined_call_operand.vmem [shape: f32[3,384], index: 1, kind: input, shape index: {}]
  %s2 = inlined_call_operand.vmem [shape: f32[16,3], index: 2, kind: input, shape index: {}]
  %s3 = inlined_call_operand.vmem [shape: f32[16,1], index: 3, kind: input, shape index: {}]
  %s4 = inlined_call_operand.vmem [shape: f32[64,16], index: 4, kind: input, shape index: {}]
  %s5 = inlined_call_operand.vmem [shape: f32[32,1], index: 5, kind: input, shape index: {}]
  %s6 = inlined_call_operand.vmem [shape: f32[32,32], index: 6, kind: input, shape index: {}]
  %s7 = inlined_call_operand.vmem [shape: f32[16,1], index: 7, kind: input, shape index: {}]
  %s8 = inlined_call_operand.hbm [shape: f32[16,128], index: 8, kind: output, shape index: {}]
  %s9 = sld [smem:[#allocation0]]
  $region42: #{tpu_custom_call.1} parent=0
    _
  %s11 = ssub.s32 1, %s9
  %s12 = scalar_select 0, %s11, %s9
  $region1: #{tpu_custom_call.1} parent=0
    #allocation2 [shape = 'u8[8192]{0}', space=vmem, size = 0x2000, scoped, tag = 'output window, operand 0, single buffered']
    #allocation3 [shape = 's32[1]{0}', space=sflag, size = 0x4, scoped, tag = 'scoped memory for tpu_custom_call.1']
    %13 = vsyncpa [#allocation3], 0
    // Predicated region
    $region2: #{tpu_custom_call.1} parent=1 // pred_check
      _
    $region3: #{tpu_custom_call.1} parent=1 // pred_check_branch
      %15 = sbr.rel (0) target = $region5
    $region4: #{tpu_custom_call.1} parent=1 // pred_region
      _
    $region5: #{tpu_custom_call.1} parent=1 // pred_fallthru
      _
    // Predicated region
    $region6: #{tpu_custom_call.1} parent=1 // pred_check
      _
    $region7: #{tpu_custom_call.1} parent=1 // pred_check_branch
      %17 = sbr.rel (0) target = $region9
    $region8: #{tpu_custom_call.1} parent=1 // pred_region
      _
    $region9: #{tpu_custom_call.1} parent=1 // pred_fallthru
      _
    // Predicated region
    $region10: #{tpu_custom_call.1} parent=1 // pred_check
      _
    $region11: #{tpu_custom_call.1} parent=1 // pred_check_branch
      %19 = sbr.rel (0) target = $region13
    $region12: #{tpu_custom_call.1} parent=1 // pred_region
      _
    $region13: #{tpu_custom_call.1} parent=1 // pred_fallthru
      _
    // Predicated region
    $region14: #{tpu_custom_call.1} parent=1 // pred_check
      _
    $region15: #{tpu_custom_call.1} parent=1 // pred_check_branch
      %21 = sbr.rel (0) target = $region17
    $region16: #{tpu_custom_call.1} parent=1 // pred_region
      _
    $region17: #{tpu_custom_call.1} parent=1 // pred_fallthru
      _
    // Predicated region
    $region18: #{tpu_custom_call.1} parent=1 // pred_check
      _
    $region19: #{tpu_custom_call.1} parent=1 // pred_check_branch
      %23 = sbr.rel (0) target = $region21
    $region20: #{tpu_custom_call.1} parent=1 // pred_region
      _
    $region21: #{tpu_custom_call.1} parent=1 // pred_fallthru
      _
    // Predicated region
    $region22: #{tpu_custom_call.1} parent=1 // pred_check
      _
    $region23: #{tpu_custom_call.1} parent=1 // pred_check_branch
      %25 = sbr.rel (0) target = $region25
    $region24: #{tpu_custom_call.1} parent=1 // pred_region
      _
    $region25: #{tpu_custom_call.1} parent=1 // pred_fallthru
      _
    // Predicated region
    $region26: #{tpu_custom_call.1} parent=1 // pred_check
      _
    $region27: #{tpu_custom_call.1} parent=1 // pred_check_branch
      %27 = sbr.rel (0) target = $region29
    $region28: #{tpu_custom_call.1} parent=1 // pred_region
      _
    $region29: #{tpu_custom_call.1} parent=1 // pred_fallthru
      _
    // Predicated region
    $region30: #{tpu_custom_call.1} parent=1 // pred_check
      _
    $region31: #{tpu_custom_call.1} parent=1 // pred_check_branch
      %29 = sbr.rel (0) target = $region33
    $region32: #{tpu_custom_call.1} parent=1 // pred_region
      _
    $region33: #{tpu_custom_call.1} parent=1 // pred_fallthru
      _
    %v30 = vld [vmem:[%s0] sm:$0x7]
    %v31 = vlaneseq
    %v32 = vshrl.u32 %v31, 7
    %v33 = vadd.s32 %v32, 8
    %v34 = vadd.s32 %v32, 16
    %v35 = vadd.s32 %v32, 24
    %v36 = vadd.s32 %v32, 32
    %v37 = vadd.s32 %v32, 40
    %v38 = vadd.s32 %v32, 48
    %v39 = vadd.s32 %v32, 56
    %v40 = vadd.s32 %v32, 64
    %v41 = vadd.s32 %v32, 72
    %v42 = vadd.s32 %v32, 80
    %v43 = vadd.s32 %v32, 88
    %v44 = vadd.s32 %v32, 96
    %v45 = vadd.s32 %v32, 104
    %v46 = vadd.s32 %v32, 112
    %v47 = vadd.s32 %v32, 120
    %v48 = vlaneseq
    %v49 = vshrl.u32 %v48, 7
    %v50 = vsub.s32 0, %v49
    %v51 = vrot.slane %v30, %v50
    %v52 = vlaneseq
    %v53 = vshrl.u32 %v52, 7
    %v54 = vsub.s32 1, %v53
    %v55 = vrot.slane %v30, %v54
    %v56 = vlaneseq
    %v57 = vshrl.u32 %v56, 7
    %v58 = vsub.s32 2, %v57
    %v59 = vrot.slane %v30, %v58
    %vm60 = vcmp.eq.s32.totalorder %v51, %v32
    %vm61 = vcmp.eq.s32.totalorder %v55, %v32
    %vm62 = vcmp.eq.s32.totalorder %v59, %v32
    %vm63 = vcmp.eq.s32.totalorder %v51, %v33
    %vm64 = vcmp.eq.s32.totalorder %v55, %v33
    %vm65 = vcmp.eq.s32.totalorder %v59, %v33
    %vm66 = vcmp.eq.s32.totalorder %v51, %v34
    %vm67 = vcmp.eq.s32.totalorder %v55, %v34
    %vm68 = vcmp.eq.s32.totalorder %v59, %v34
    %vm69 = vcmp.eq.s32.totalorder %v51, %v35
    %vm70 = vcmp.eq.s32.totalorder %v55, %v35
    %vm71 = vcmp.eq.s32.totalorder %v59, %v35
    %vm72 = vcmp.eq.s32.totalorder %v51, %v36
    %vm73 = vcmp.eq.s32.totalorder %v55, %v36
    %vm74 = vcmp.eq.s32.totalorder %v59, %v36
    %vm75 = vcmp.eq.s32.totalorder %v51, %v37
    %vm76 = vcmp.eq.s32.totalorder %v55, %v37
    %vm77 = vcmp.eq.s32.totalorder %v59, %v37
    %vm78 = vcmp.eq.s32.totalorder %v51, %v38
    %vm79 = vcmp.eq.s32.totalorder %v55, %v38
    %vm80 = vcmp.eq.s32.totalorder %v59, %v38
    %vm81 = vcmp.eq.s32.totalorder %v51, %v39
    %vm82 = vcmp.eq.s32.totalorder %v55, %v39
    %vm83 = vcmp.eq.s32.totalorder %v59, %v39
    %vm84 = vcmp.eq.s32.totalorder %v51, %v40
    %vm85 = vcmp.eq.s32.totalorder %v55, %v40
    %vm86 = vcmp.eq.s32.totalorder %v59, %v40
    %vm87 = vcmp.eq.s32.totalorder %v51, %v41
    %vm88 = vcmp.eq.s32.totalorder %v55, %v41
    %vm89 = vcmp.eq.s32.totalorder %v59, %v41
    %vm90 = vcmp.eq.s32.totalorder %v51, %v42
    %vm91 = vcmp.eq.s32.totalorder %v55, %v42
    %vm92 = vcmp.eq.s32.totalorder %v59, %v42
    %vm93 = vcmp.eq.s32.totalorder %v51, %v43
    %vm94 = vcmp.eq.s32.totalorder %v55, %v43
    %vm95 = vcmp.eq.s32.totalorder %v59, %v43
    %vm96 = vcmp.eq.s32.totalorder %v51, %v44
    %vm97 = vcmp.eq.s32.totalorder %v55, %v44
    %vm98 = vcmp.eq.s32.totalorder %v59, %v44
    %vm99 = vcmp.eq.s32.totalorder %v51, %v45
    %vm100 = vcmp.eq.s32.totalorder %v55, %v45
    %vm101 = vcmp.eq.s32.totalorder %v59, %v45
    %vm102 = vcmp.eq.s32.totalorder %v51, %v46
    %vm103 = vcmp.eq.s32.totalorder %v55, %v46
    %vm104 = vcmp.eq.s32.totalorder %v59, %v46
    %vm105 = vcmp.eq.s32.totalorder %v51, %v47
    %vm106 = vcmp.eq.s32.totalorder %v55, %v47
    %vm107 = vcmp.eq.s32.totalorder %v59, %v47
    %v108 = vsel %vm60, 1, 0
    %v109 = vsel %vm61, 1, 0
    %v110 = vsel %vm62, 1, 0
    %v111 = vsel %vm63, 1, 0
    %v112 = vsel %vm64, 1, 0
    %v113 = vsel %vm65, 1, 0
    %v114 = vsel %vm66, 1, 0
    %v115 = vsel %vm67, 1, 0
    %v116 = vsel %vm68, 1, 0
    %v117 = vsel %vm69, 1, 0
    %v118 = vsel %vm70, 1, 0
    %v119 = vsel %vm71, 1, 0
    %v120 = vsel %vm72, 1, 0
    %v121 = vsel %vm73, 1, 0
    %v122 = vsel %vm74, 1, 0
    %v123 = vsel %vm75, 1, 0
    %v124 = vsel %vm76, 1, 0
    %v125 = vsel %vm77, 1, 0
    %v126 = vsel %vm78, 1, 0
    %v127 = vsel %vm79, 1, 0
    %v128 = vsel %vm80, 1, 0
    %v129 = vsel %vm81, 1, 0
    %v130 = vsel %vm82, 1, 0
    %v131 = vsel %vm83, 1, 0
    %v132 = vsel %vm84, 1, 0
    %v133 = vsel %vm85, 1, 0
    %v134 = vsel %vm86, 1, 0
    %v135 = vsel %vm87, 1, 0
    %v136 = vsel %vm88, 1, 0
    %v137 = vsel %vm89, 1, 0
    %v138 = vsel %vm90, 1, 0
    %v139 = vsel %vm91, 1, 0
    %v140 = vsel %vm92, 1, 0
    %v141 = vsel %vm93, 1, 0
    %v142 = vsel %vm94, 1, 0
    %v143 = vsel %vm95, 1, 0
    %v144 = vsel %vm96, 1, 0
    %v145 = vsel %vm97, 1, 0
    %v146 = vsel %vm98, 1, 0
    %v147 = vsel %vm99, 1, 0
    %v148 = vsel %vm100, 1, 0
    %v149 = vsel %vm101, 1, 0
    %v150 = vsel %vm102, 1, 0
    %v151 = vsel %vm103, 1, 0
    %v152 = vsel %vm104, 1, 0
    %v153 = vsel %vm105, 1, 0
    %v154 = vsel %vm106, 1, 0
    %v155 = vsel %vm107, 1, 0
    %v156 = vcvt.s32.f32 %v108
    %v157 = vcvt.s32.f32 %v109
    %v158 = vcvt.s32.f32 %v110
    %v159 = vcvt.s32.f32 %v111
    %v160 = vcvt.s32.f32 %v112
    %v161 = vcvt.s32.f32 %v113
    %v162 = vcvt.s32.f32 %v114
    %v163 = vcvt.s32.f32 %v115
    %v164 = vcvt.s32.f32 %v116
    %v165 = vcvt.s32.f32 %v117
    %v166 = vcvt.s32.f32 %v118
    %v167 = vcvt.s32.f32 %v119
    %v168 = vcvt.s32.f32 %v120
    %v169 = vcvt.s32.f32 %v121
    %v170 = vcvt.s32.f32 %v122
    %v171 = vcvt.s32.f32 %v123
    %v172 = vcvt.s32.f32 %v124
    %v173 = vcvt.s32.f32 %v125
    %v174 = vcvt.s32.f32 %v126
    %v175 = vcvt.s32.f32 %v127
    %v176 = vcvt.s32.f32 %v128
    %v177 = vcvt.s32.f32 %v129
    %v178 = vcvt.s32.f32 %v130
    %v179 = vcvt.s32.f32 %v131
    %v180 = vcvt.s32.f32 %v132
    %v181 = vcvt.s32.f32 %v133
    %v182 = vcvt.s32.f32 %v134
    %v183 = vcvt.s32.f32 %v135
    %v184 = vcvt.s32.f32 %v136
    %v185 = vcvt.s32.f32 %v137
    %v186 = vcvt.s32.f32 %v138
    %v187 = vcvt.s32.f32 %v139
    %v188 = vcvt.s32.f32 %v140
    %v189 = vcvt.s32.f32 %v141
    %v190 = vcvt.s32.f32 %v142
    %v191 = vcvt.s32.f32 %v143
    %v192 = vcvt.s32.f32 %v144
    %v193 = vcvt.s32.f32 %v145
    %v194 = vcvt.s32.f32 %v146
    %v195 = vcvt.s32.f32 %v147
    %v196 = vcvt.s32.f32 %v148
    %v197 = vcvt.s32.f32 %v149
    %v198 = vcvt.s32.f32 %v150
    %v199 = vcvt.s32.f32 %v151
    %v200 = vcvt.s32.f32 %v152
    %v201 = vcvt.s32.f32 %v153
    %v202 = vcvt.s32.f32 %v154
    %v203 = vcvt.s32.f32 %v155
    %v204 = vld [vmem:[%s2] sm:$0xff]
    %v205 = vld [vmem:[%s2 + $0x8] sm:$0xff]
    %v206 = vld [vmem:[%s3] sm:$0xff]
    %v207 = vld [vmem:[%s3 + $0x8] sm:$0xff]
    %v208 = vld [vmem:[%s1] sm:$0x77]
    %v209 = vld [vmem:[%s1 + $0x8] sm:$0x7]
    %v212 = vcombine.high %v208, %v208
    %vm213 = vcmask 23552
    %v215 = vsel %vm213, %v204, 0
    %v218 = vsel %vm213, %v205, 0
    %vm220 = vcmask 1042432
    %v221 = vsel %vm220, %v208, 0
    %v223 = vsel %vm220, %v212, 0
    %v225 = vsel %vm220, %v209, 0
    %227 = vmatprep.subr.mxu0 0.0
    %228 = vmatpush1.msra.mxu0 0.0
    %229 = vmatprep.subr.mxu0 0.0
    %230 = vmatpush1.msra.mxu0 0.0
    %231 = vmatprep.subr.mxu0 0.0
    %232 = vmatpush1.msra.mxu0 0.0
    %233 = vmatprep.subr.mxu0 0.0
    %234 = vmatpush1.msra.mxu0 0.0
    %235 = vmatprep.subr.mxu0 0.0
    %236 = vmatpush1.msra.mxu0 0.0
    %237 = vmatprep.subr.mxu0 0.0
    %238 = vmatpush1.msra.mxu0 0.0
    %239 = vmatprep.subr.mxu0 0.0
    %240 = vmatpush1.msra.mxu0 0.0
    %241 = vmatprep.subr.mxu0 0.0
    %242 = vmatpush1.msra.mxu0 0.0
    %243 = vmatprep.subr.mxu0 0.0
    %244 = vmatpush1.msra.mxu0 0.0
    %245 = vmatprep.subr.mxu0 0.0
    %246 = vmatpush1.msra.mxu0 0.0
    %247 = vmatprep.subr.mxu0 0.0
    %248 = vmatpush1.msra.mxu0 0.0
    %249 = vmatprep.subr.mxu0 0.0
    %250 = vmatpush1.msra.mxu0 0.0
    %251 = vmatprep.subr.mxu0 0.0
    %252 = vmatpush1.msra.mxu0 0.0
    %253 = vmatprep.subr.mxu0 0.0
    %254 = vmatpush1.msra.mxu0 0.0
    %255 = vmatprep.subr.mxu0 0.0
    %256 = vmatpush1.msra.mxu0 0.0
    %257 = vmatprep.subr.mxu0 %v223
    %258 = vmatpush1.msra.mxu0 %v221
    %259 = vmatprep.subr.mxu0 0.0
    %260 = vmatpush2.msra.mxu0 0.0
    %261 = vmatprep.subr.mxu0 0.0
    %262 = vmatpush2.msra.mxu0 0.0
    %263 = vmatprep.subr.mxu0 0.0
    %264 = vmatpush2.msra.mxu0 0.0
    %265 = vmatprep.subr.mxu0 0.0
    %266 = vmatpush2.msra.mxu0 0.0
    %267 = vmatprep.subr.mxu0 0.0
    %268 = vmatpush2.msra.mxu0 0.0
    %269 = vmatprep.subr.mxu0 0.0
    %270 = vmatpush2.msra.mxu0 0.0
    %271 = vmatprep.subr.mxu0 0.0
    %272 = vmatpush2.msra.mxu0 0.0
    %273 = vmatprep.subr.mxu0 0.0
    %274 = vmatpush2.msra.mxu0 0.0
    %275 = vmatprep.subr.mxu0 0.0
    %276 = vmatpush2.msra.mxu0 0.0
    %277 = vmatprep.subr.mxu0 0.0
    %278 = vmatpush2.msra.mxu0 0.0
    %279 = vmatprep.subr.mxu0 0.0
    %280 = vmatpush2.msra.mxu0 0.0
    %281 = vmatprep.subr.mxu0 0.0
    %282 = vmatpush2.msra.mxu0 0.0
    %283 = vmatprep.subr.mxu0 0.0
    %284 = vmatpush2.msra.mxu0 0.0
    %285 = vmatprep.subr.mxu0 0.0
    %286 = vmatpush2.msra.mxu0 0.0
    %287 = vmatprep.subr.mxu0 0.0
    %288 = vmatpush2.msra.mxu0 0.0
    %289 = vmatprep.subr.mxu0 0.0
    %290 = vmatpush2.msra.mxu0 0.0
    %291 = vmatprep.mubr.f32.mxu0 0.0
    %292 = vmatmul.mubr.f32.gmra.mxu0 %v215
    %v293 = vpop.f32.mrf.mxu0
    %v294 = vadd.f32 0.0, %v293
    %v295 = vpop.f32.mrf.mxu0
    %v296 = vadd.f32 0.0, %v295
    %297 = vmatprep.mubr.f32.mxu0 0.0
    %298 = vmatmul.mubr.f32.gmra.mxu0 %v218
    %v299 = vpop.f32.mrf.mxu0
    %v300 = vadd.f32 0.0, %v299
    %v301 = vpop.f32.mrf.mxu0
    %v302 = vadd.f32 0.0, %v301
    %303 = vdwg.mxu0
    %304 = vmatprep.subr.mxu0 0.0
    %305 = vmatpush1.msra.mxu0 0.0
    %306 = vmatprep.subr.mxu0 0.0
    %307 = vmatpush1.msra.mxu0 0.0
    %308 = vmatprep.subr.mxu0 0.0
    %309 = vmatpush1.msra.mxu0 0.0
    %310 = vmatprep.subr.mxu0 0.0
    %311 = vmatpush1.msra.mxu0 0.0
    %312 = vmatprep.subr.mxu0 0.0
    %313 = vmatpush1.msra.mxu0 0.0
    %314 = vmatprep.subr.mxu0 0.0
    %315 = vmatpush1.msra.mxu0 0.0
    %316 = vmatprep.subr.mxu0 0.0
    %317 = vmatpush1.msra.mxu0 0.0
    %318 = vmatprep.subr.mxu0 0.0
    %319 = vmatpush1.msra.mxu0 0.0
    %320 = vmatprep.subr.mxu0 0.0
    %321 = vmatpush1.msra.mxu0 0.0
    %322 = vmatprep.subr.mxu0 0.0
    %323 = vmatpush1.msra.mxu0 0.0
    %324 = vmatprep.subr.mxu0 0.0
    %325 = vmatpush1.msra.mxu0 0.0
    %326 = vmatprep.subr.mxu0 0.0
    %327 = vmatpush1.msra.mxu0 0.0
    %328 = vmatprep.subr.mxu0 0.0
    %329 = vmatpush1.msra.mxu0 0.0
    %330 = vmatprep.subr.mxu0 0.0
    %331 = vmatpush1.msra.mxu0 0.0
    %332 = vmatprep.subr.mxu0 0.0
    %333 = vmatpush1.msra.mxu0 0.0
    %334 = vmatprep.subr.mxu0 0.0
    %335 = vmatpush1.msra.mxu0 %v225
    %336 = vmatprep.subr.mxu0 0.0
    %337 = vmatpush2.msra.mxu0 0.0
    %338 = vmatprep.subr.mxu0 0.0
    %339 = vmatpush2.msra.mxu0 0.0
    %340 = vmatprep.subr.mxu0 0.0
    %341 = vmatpush2.msra.mxu0 0.0
    %342 = vmatprep.subr.mxu0 0.0
    %343 = vmatpush2.msra.mxu0 0.0
    %344 = vmatprep.subr.mxu0 0.0
    %345 = vmatpush2.msra.mxu0 0.0
    %346 = vmatprep.subr.mxu0 0.0
    %347 = vmatpush2.msra.mxu0 0.0
    %348 = vmatprep.subr.mxu0 0.0
    %349 = vmatpush2.msra.mxu0 0.0
    %350 = vmatprep.subr.mxu0 0.0
    %351 = vmatpush2.msra.mxu0 0.0
    %352 = vmatprep.subr.mxu0 0.0
    %353 = vmatpush2.msra.mxu0 0.0
    %354 = vmatprep.subr.mxu0 0.0
    %355 = vmatpush2.msra.mxu0 0.0
    %356 = vmatprep.subr.mxu0 0.0
    %357 = vmatpush2.msra.mxu0 0.0
    %358 = vmatprep.subr.mxu0 0.0
    %359 = vmatpush2.msra.mxu0 0.0
    %360 = vmatprep.subr.mxu0 0.0
    %361 = vmatpush2.msra.mxu0 0.0
    %362 = vmatprep.subr.mxu0 0.0
    %363 = vmatpush2.msra.mxu0 0.0
    %364 = vmatprep.subr.mxu0 0.0
    %365 = vmatpush2.msra.mxu0 0.0
    %366 = vmatprep.subr.mxu0 0.0
    %367 = vmatpush2.msra.mxu0 0.0
    %368 = vmatprep.mubr.f32.mxu0 0.0
    %369 = vmatmul.mubr.f32.gmra.mxu0 %v215
    %v370 = vpop.f32.mrf.mxu0
    %v371 = vadd.f32 0.0, %v370
    %v372 = vpop.f32.mrf.mxu0
    %373 = vmatprep.mubr.f32.mxu0 0.0
    %374 = vmatmul.mubr.f32.gmra.mxu0 %v218
    %v375 = vpop.f32.mrf.mxu0
    %v376 = vadd.f32 0.0, %v375
    %v377 = vpop.f32.mrf.mxu0
    %378 = vdwg.mxu0
    %v379 = vmax.f32 %v294, %v296
    %v380 = vmax.f32 %v300, %v302
    %v381 = vmax.f32 %v379, %v371
    %v382 = vmax.f32 %v380, %v376
    %384 = vset.pattern.permute.xlu0 0
    %385 = vperm.xlu0 %384, %v206
    %v386 = vpop.permute.xlu0 %385
    %389 = vset.pattern.permute.xlu0 0
    %390 = vperm.xlu0 %389, %v207
    %v391 = vpop.permute.xlu0 %390
    %v393 = vadd.f32 %v381, %v386
    %v394 = vadd.f32 %v382, %v391
    %v395 = vld [vmem:[%s4] sm:$0xff]
    %v396 = vld [vmem:[%s4 + $0x8] sm:$0xff]
    %v397 = vld [vmem:[%s4 + $0x10] sm:$0xff]
    %v398 = vld [vmem:[%s4 + $0x18] sm:$0xff]
    %v399 = vld [vmem:[%s4 + $0x20] sm:$0xff]
    %v400 = vld [vmem:[%s4 + $0x28] sm:$0xff]
    %v401 = vld [vmem:[%s4 + $0x30] sm:$0xff]
    %v402 = vld [vmem:[%s4 + $0x38] sm:$0xff]
    %v403 = vld [vmem:[%s5] sm:$0xff]
    %v404 = vld [vmem:[%s5 + $0x8] sm:$0xff]
    %v405 = vld [vmem:[%s5 + $0x10] sm:$0xff]
    %v406 = vld [vmem:[%s5 + $0x18] sm:$0xff]
    %407 = vadd.xlane.f32.xlu0 %v393
    %v408 = vpop.xlane.xlu0 %407
    %409 = vadd.xlane.f32.xlu0 %v394
    %v410 = vpop.xlane.xlu0 %409
    %v411 = vmul.f32 %v408, 0.0078125
    %v412 = vmul.f32 %v410, 0.0078125
    %v413 = vmul.f32 %v393, %v393
    %v414 = vmul.f32 %v394, %v394
    %415 = vadd.xlane.f32.xlu0 %v413
    %v416 = vpop.xlane.xlu0 %415
    %417 = vadd.xlane.f32.xlu0 %v414
    %v418 = vpop.xlane.xlu0 %417
    %v419 = vmul.f32 %v416, 0.0078125
    %v420 = vmul.f32 %v418, 0.0078125
    %v421 = vmul.f32 %v411, %v411
    %v422 = vmul.f32 %v412, %v412
    %v423 = vsub.f32 %v419, %v421
    %v424 = vsub.f32 %v420, %v422
    %v425 = vsub.f32 %v393, %v411
    %v426 = vsub.f32 %v394, %v412
    %v427 = vadd.f32 %v423, 1e-05
    %v428 = vadd.f32 %v424, 1e-05
    %v429 = vrsqrt.pop %v427
    %v430 = vrsqrt.pop %v428
    %v431 = vmul.f32 %v425, %v429
    %v432 = vmul.f32 %v426, %v430
    %vm433 = vcmp.ge.f32.partialorder %v431, 0.0
    %vm434 = vcmp.ge.f32.partialorder %v432, 0.0
    %v435 = vmul.f32 %v431, 0.2
    %v436 = vmul.f32 %v432, 0.2
    %v437 = vsel %vm433, %v431, %v435
    %v438 = vsel %vm434, %v432, %v436
    %vm439 = vcmask 130048
    %v441 = vsel %vm439, %v395, 0
    %v444 = vsel %vm439, %v396, 0
    %v447 = vsel %vm439, %v397, 0
    %v450 = vsel %vm439, %v398, 0
    %v453 = vsel %vm439, %v399, 0
    %v456 = vsel %vm439, %v400, 0
    %v459 = vsel %vm439, %v401, 0
    %v462 = vsel %vm439, %v402, 0
    %464 = vmatprep.subr.mxu0 0.0
    %465 = vmatpush1.msra.mxu0 0.0
    %466 = vmatprep.subr.mxu0 0.0
    %467 = vmatpush1.msra.mxu0 0.0
    %468 = vmatprep.subr.mxu0 0.0
    %469 = vmatpush1.msra.mxu0 0.0
    %470 = vmatprep.subr.mxu0 0.0
    %471 = vmatpush1.msra.mxu0 0.0
    %472 = vmatprep.subr.mxu0 0.0
    %473 = vmatpush1.msra.mxu0 0.0
    %474 = vmatprep.subr.mxu0 0.0
    %475 = vmatpush1.msra.mxu0 0.0
    %476 = vmatprep.subr.mxu0 0.0
    %477 = vmatpush1.msra.mxu0 0.0
    %478 = vmatprep.subr.mxu0 0.0
    %479 = vmatpush1.msra.mxu0 0.0
    %480 = vmatprep.subr.mxu0 0.0
    %481 = vmatpush1.msra.mxu0 0.0
    %482 = vmatprep.subr.mxu0 0.0
    %483 = vmatpush1.msra.mxu0 0.0
    %484 = vmatprep.subr.mxu0 0.0
    %485 = vmatpush1.msra.mxu0 0.0
    %486 = vmatprep.subr.mxu0 0.0
    %487 = vmatpush1.msra.mxu0 0.0
    %488 = vmatprep.subr.mxu0 0.0
    %489 = vmatpush1.msra.mxu0 0.0
    %490 = vmatprep.subr.mxu0 0.0
    %491 = vmatpush1.msra.mxu0 0.0
    %492 = vmatprep.subr.mxu0 0.0
    %493 = vmatpush1.msra.mxu0 %v438
    %494 = vmatprep.subr.mxu0 0.0
    %495 = vmatpush1.msra.mxu0 %v437
    %496 = vmatprep.subr.mxu0 0.0
    %497 = vmatpush2.msra.mxu0 0.0
    %498 = vmatprep.subr.mxu0 0.0
    %499 = vmatpush2.msra.mxu0 0.0
    %500 = vmatprep.subr.mxu0 0.0
    %501 = vmatpush2.msra.mxu0 0.0
    %502 = vmatprep.subr.mxu0 0.0
    %503 = vmatpush2.msra.mxu0 0.0
    %504 = vmatprep.subr.mxu0 0.0
    %505 = vmatpush2.msra.mxu0 0.0
    %506 = vmatprep.subr.mxu0 0.0
    %507 = vmatpush2.msra.mxu0 0.0
    %508 = vmatprep.subr.mxu0 0.0
    %509 = vmatpush2.msra.mxu0 0.0
    %510 = vmatprep.subr.mxu0 0.0
    %511 = vmatpush2.msra.mxu0 0.0
    %512 = vmatprep.subr.mxu0 0.0
    %513 = vmatpush2.msra.mxu0 0.0
    %514 = vmatprep.subr.mxu0 0.0
    %515 = vmatpush2.msra.mxu0 0.0
    %516 = vmatprep.subr.mxu0 0.0
    %517 = vmatpush2.msra.mxu0 0.0
    %518 = vmatprep.subr.mxu0 0.0
    %519 = vmatpush2.msra.mxu0 0.0
    %520 = vmatprep.subr.mxu0 0.0
    %521 = vmatpush2.msra.mxu0 0.0
    %522 = vmatprep.subr.mxu0 0.0
    %523 = vmatpush2.msra.mxu0 0.0
    %524 = vmatprep.subr.mxu0 0.0
    %525 = vmatpush2.msra.mxu0 0.0
    %526 = vmatprep.subr.mxu0 0.0
    %527 = vmatpush2.msra.mxu0 0.0
    %528 = vmatprep.mubr.f32.mxu0 0.0
    %529 = vmatmul.mubr.f32.gmra.mxu0 %v441
    %v530 = vpop.f32.mrf.mxu0
    %v531 = vadd.f32 0.0, %v530
    %v532 = vpop.f32.mrf.mxu0
    %533 = vmatprep.mubr.f32.mxu0 0.0
    %534 = vmatmul.mubr.f32.gmra.mxu0 %v444
    %v535 = vpop.f32.mrf.mxu0
    %v536 = vadd.f32 0.0, %v535
    %v537 = vpop.f32.mrf.mxu0
    %538 = vmatprep.mubr.f32.mxu0 0.0
    %539 = vmatmul.mubr.f32.gmra.mxu0 %v447
    %v540 = vpop.f32.mrf.mxu0
    %v541 = vadd.f32 0.0, %v540
    %v542 = vpop.f32.mrf.mxu0
    %543 = vmatprep.mubr.f32.mxu0 0.0
    %544 = vmatmul.mubr.f32.gmra.mxu0 %v450
    %v545 = vpop.f32.mrf.mxu0
    %v546 = vadd.f32 0.0, %v545
    %v547 = vpop.f32.mrf.mxu0
    %548 = vmatprep.mubr.f32.mxu0 0.0
    %549 = vmatmul.mubr.f32.gmra.mxu0 %v453
    %v550 = vpop.f32.mrf.mxu0
    %v551 = vadd.f32 0.0, %v550
    %v552 = vpop.f32.mrf.mxu0
    %553 = vmatprep.mubr.f32.mxu0 0.0
    %554 = vmatmul.mubr.f32.gmra.mxu0 %v456
    %v555 = vpop.f32.mrf.mxu0
    %v556 = vadd.f32 0.0, %v555
    %v557 = vpop.f32.mrf.mxu0
    %558 = vmatprep.mubr.f32.mxu0 0.0
    %559 = vmatmul.mubr.f32.gmra.mxu0 %v459
    %v560 = vpop.f32.mrf.mxu0
    %v561 = vadd.f32 0.0, %v560
    %v562 = vpop.f32.mrf.mxu0
    %563 = vmatprep.mubr.f32.mxu0 0.0
    %564 = vmatmul.mubr.f32.gmra.mxu0 %v462
    %v565 = vpop.f32.mrf.mxu0
    %v566 = vadd.f32 0.0, %v565
    %v567 = vpop.f32.mrf.mxu0
    %568 = vdwg.mxu0
    %569 = vmatprep.subr.mxu0 %v202
    %570 = vmatpush1.msra.mxu0 %v201
    %571 = vmatprep.subr.mxu0 %v199
    %572 = vmatpush1.msra.mxu0 %v198
    %573 = vmatprep.subr.mxu0 %v196
    %574 = vmatpush1.msra.mxu0 %v195
    %575 = vmatprep.subr.mxu0 %v193
    %576 = vmatpush1.msra.mxu0 %v192
    %577 = vmatprep.subr.mxu0 %v190
    %578 = vmatpush1.msra.mxu0 %v189
    %579 = vmatprep.subr.mxu0 %v187
    %580 = vmatpush1.msra.mxu0 %v186
    %581 = vmatprep.subr.mxu0 %v184
    %582 = vmatpush1.msra.mxu0 %v183
    %583 = vmatprep.subr.mxu0 %v181
    %584 = vmatpush1.msra.mxu0 %v180
    %585 = vmatprep.subr.mxu0 %v178
    %586 = vmatpush1.msra.mxu0 %v177
    %587 = vmatprep.subr.mxu0 %v175
    %588 = vmatpush1.msra.mxu0 %v174
    %589 = vmatprep.subr.mxu0 %v172
    %590 = vmatpush1.msra.mxu0 %v171
    %591 = vmatprep.subr.mxu0 %v169
    %592 = vmatpush1.msra.mxu0 %v168
    %593 = vmatprep.subr.mxu0 %v166
    %594 = vmatpush1.msra.mxu0 %v165
    %595 = vmatprep.subr.mxu0 %v163
    %596 = vmatpush1.msra.mxu0 %v162
    %597 = vmatprep.subr.mxu0 %v160
    %598 = vmatpush1.msra.mxu0 %v159
    %599 = vmatprep.subr.mxu0 %v157
    %600 = vmatpush1.msra.mxu0 %v156
    %601 = vmatprep.subr.mxu0 0.0
    %602 = vmatpush2.msra.mxu0 0.0
    %603 = vmatprep.subr.mxu0 0.0
    %604 = vmatpush2.msra.mxu0 0.0
    %605 = vmatprep.subr.mxu0 0.0
    %606 = vmatpush2.msra.mxu0 0.0
    %607 = vmatprep.subr.mxu0 0.0
    %608 = vmatpush2.msra.mxu0 0.0
    %609 = vmatprep.subr.mxu0 0.0
    %610 = vmatpush2.msra.mxu0 0.0
    %611 = vmatprep.subr.mxu0 0.0
    %612 = vmatpush2.msra.mxu0 0.0
    %613 = vmatprep.subr.mxu0 0.0
    %614 = vmatpush2.msra.mxu0 0.0
    %615 = vmatprep.subr.mxu0 0.0
    %616 = vmatpush2.msra.mxu0 0.0
    %617 = vmatprep.subr.mxu0 0.0
    %618 = vmatpush2.msra.mxu0 0.0
    %619 = vmatprep.subr.mxu0 0.0
    %620 = vmatpush2.msra.mxu0 0.0
    %621 = vmatprep.subr.mxu0 0.0
    %622 = vmatpush2.msra.mxu0 0.0
    %623 = vmatprep.subr.mxu0 0.0
    %624 = vmatpush2.msra.mxu0 0.0
    %625 = vmatprep.subr.mxu0 0.0
    %626 = vmatpush2.msra.mxu0 0.0
    %627 = vmatprep.subr.mxu0 0.0
    %628 = vmatpush2.msra.mxu0 0.0
    %629 = vmatprep.subr.mxu0 0.0
    %630 = vmatpush2.msra.mxu0 0.0
    %631 = vmatprep.subr.mxu0 0.0
    %632 = vmatpush2.msra.mxu0 0.0
    %633 = vmatprep.mubr.f32.mxu0 0.0
    %634 = vmatmul.mubr.f32.gmra.mxu0 %v531
    %v635 = vpop.f32.mrf.mxu0
    %v636 = vadd.f32 0.0, %v635
    %v637 = vpop.f32.mrf.mxu0
    %v638 = vadd.f32 0.0, %v637
    %639 = vmatprep.mubr.f32.mxu0 0.0
    %640 = vmatmul.mubr.f32.gmra.mxu0 %v536
    %v641 = vpop.f32.mrf.mxu0
    %v642 = vadd.f32 0.0, %v641
    %v643 = vpop.f32.mrf.mxu0
    %v644 = vadd.f32 0.0, %v643
    %645 = vmatprep.mubr.f32.mxu0 0.0
    %646 = vmatmul.mubr.f32.gmra.mxu0 %v541
    %v647 = vpop.f32.mrf.mxu0
    %v648 = vadd.f32 0.0, %v647
    %v649 = vpop.f32.mrf.mxu0
    %v650 = vadd.f32 0.0, %v649
    %651 = vmatprep.mubr.f32.mxu0 0.0
    %652 = vmatmul.mubr.f32.gmra.mxu0 %v546
    %v653 = vpop.f32.mrf.mxu0
    %v654 = vadd.f32 0.0, %v653
    %v655 = vpop.f32.mrf.mxu0
    %v656 = vadd.f32 0.0, %v655
    %657 = vdwg.mxu0
    %658 = vmatprep.subr.mxu0 0.0
    %659 = vmatpush1.msra.mxu0 %v203
    %660 = vmatprep.subr.mxu0 0.0
    %661 = vmatpush1.msra.mxu0 %v200
    %662 = vmatprep.subr.mxu0 0.0
    %663 = vmatpush1.msra.mxu0 %v197
    %664 = vmatprep.subr.mxu0 0.0
    %665 = vmatpush1.msra.mxu0 %v194
    %666 = vmatprep.subr.mxu0 0.0
    %667 = vmatpush1.msra.mxu0 %v191
    %668 = vmatprep.subr.mxu0 0.0
    %669 = vmatpush1.msra.mxu0 %v188
    %670 = vmatprep.subr.mxu0 0.0
    %671 = vmatpush1.msra.mxu0 %v185
    %672 = vmatprep.subr.mxu0 0.0
    %673 = vmatpush1.msra.mxu0 %v182
    %674 = vmatprep.subr.mxu0 0.0
    %675 = vmatpush1.msra.mxu0 %v179
    %676 = vmatprep.subr.mxu0 0.0
    %677 = vmatpush1.msra.mxu0 %v176
    %678 = vmatprep.subr.mxu0 0.0
    %679 = vmatpush1.msra.mxu0 %v173
    %680 = vmatprep.subr.mxu0 0.0
    %681 = vmatpush1.msra.mxu0 %v170
    %682 = vmatprep.subr.mxu0 0.0
    %683 = vmatpush1.msra.mxu0 %v167
    %684 = vmatprep.subr.mxu0 0.0
    %685 = vmatpush1.msra.mxu0 %v164
    %686 = vmatprep.subr.mxu0 0.0
    %687 = vmatpush1.msra.mxu0 %v161
    %688 = vmatprep.subr.mxu0 0.0
    %689 = vmatpush1.msra.mxu0 %v158
    %690 = vmatprep.subr.mxu0 0.0
    %691 = vmatpush2.msra.mxu0 0.0
    %692 = vmatprep.subr.mxu0 0.0
    %693 = vmatpush2.msra.mxu0 0.0
    %694 = vmatprep.subr.mxu0 0.0
    %695 = vmatpush2.msra.mxu0 0.0
    %696 = vmatprep.subr.mxu0 0.0
    %697 = vmatpush2.msra.mxu0 0.0
    %698 = vmatprep.subr.mxu0 0.0
    %699 = vmatpush2.msra.mxu0 0.0
    %700 = vmatprep.subr.mxu0 0.0
    %701 = vmatpush2.msra.mxu0 0.0
    %702 = vmatprep.subr.mxu0 0.0
    %703 = vmatpush2.msra.mxu0 0.0
    %704 = vmatprep.subr.mxu0 0.0
    %705 = vmatpush2.msra.mxu0 0.0
    %706 = vmatprep.subr.mxu0 0.0
    %707 = vmatpush2.msra.mxu0 0.0
    %708 = vmatprep.subr.mxu0 0.0
    %709 = vmatpush2.msra.mxu0 0.0
    %710 = vmatprep.subr.mxu0 0.0
    %711 = vmatpush2.msra.mxu0 0.0
    %712 = vmatprep.subr.mxu0 0.0
    %713 = vmatpush2.msra.mxu0 0.0
    %714 = vmatprep.subr.mxu0 0.0
    %715 = vmatpush2.msra.mxu0 0.0
    %716 = vmatprep.subr.mxu0 0.0
    %717 = vmatpush2.msra.mxu0 0.0
    %718 = vmatprep.subr.mxu0 0.0
    %719 = vmatpush2.msra.mxu0 0.0
    %720 = vmatprep.subr.mxu0 0.0
    %721 = vmatpush2.msra.mxu0 0.0
    %722 = vmatprep.mubr.f32.mxu0 0.0
    %723 = vmatmul.mubr.f32.gmra.mxu0 %v531
    %v724 = vpop.f32.mrf.mxu0
    %v725 = vadd.f32 0.0, %v724
    %v726 = vpop.f32.mrf.mxu0
    %727 = vmatprep.mubr.f32.mxu0 0.0
    %728 = vmatmul.mubr.f32.gmra.mxu0 %v536
    %v729 = vpop.f32.mrf.mxu0
    %v730 = vadd.f32 0.0, %v729
    %v731 = vpop.f32.mrf.mxu0
    %732 = vmatprep.mubr.f32.mxu0 0.0
    %733 = vmatmul.mubr.f32.gmra.mxu0 %v541
    %v734 = vpop.f32.mrf.mxu0
    %v735 = vadd.f32 0.0, %v734
    %v736 = vpop.f32.mrf.mxu0
    %737 = vmatprep.mubr.f32.mxu0 0.0
    %738 = vmatmul.mubr.f32.gmra.mxu0 %v546
    %v739 = vpop.f32.mrf.mxu0
    %v740 = vadd.f32 0.0, %v739
    %v741 = vpop.f32.mrf.mxu0
    %742 = vdwg.mxu0
    %v743 = vmax.f32 %v636, %v638
    %v744 = vmax.f32 %v642, %v644
    %v745 = vmax.f32 %v648, %v650
    %v746 = vmax.f32 %v654, %v656
    %v747 = vmax.f32 %v743, %v725
    %v748 = vmax.f32 %v744, %v730
    %v749 = vmax.f32 %v745, %v735
    %v750 = vmax.f32 %v746, %v740
    %v751 = vadd.f32 %v747, %v551
    %v752 = vadd.f32 %v748, %v556
    %v753 = vadd.f32 %v749, %v561
    %v754 = vadd.f32 %v750, %v566
    %756 = vset.pattern.permute.xlu0 0
    %757 = vperm.xlu0 %756, %v403
    %v758 = vpop.permute.xlu0 %757
    %761 = vset.pattern.permute.xlu0 0
    %762 = vperm.xlu0 %761, %v404
    %v763 = vpop.permute.xlu0 %762
    %766 = vset.pattern.permute.xlu0 0
    %767 = vperm.xlu0 %766, %v405
    %v768 = vpop.permute.xlu0 %767
    %771 = vset.pattern.permute.xlu0 0
    %772 = vperm.xlu0 %771, %v406
    %v773 = vpop.permute.xlu0 %772
    %v775 = vadd.f32 %v751, %v758
    %v776 = vadd.f32 %v752, %v763
    %v777 = vadd.f32 %v753, %v768
    %v778 = vadd.f32 %v754, %v773
    %v779 = vld [vmem:[%s6] sm:$0xff]
    %v780 = vld [vmem:[%s6 + $0x8] sm:$0xff]
    %v781 = vld [vmem:[%s6 + $0x10] sm:$0xff]
    %v782 = vld [vmem:[%s6 + $0x18] sm:$0xff]
    %v783 = vld [vmem:[%s7] sm:$0xff]
    %v784 = vld [vmem:[%s7 + $0x8] sm:$0xff]
    %785 = vadd.xlane.f32.xlu0 %v775
    %v786 = vpop.xlane.xlu0 %785
    %787 = vadd.xlane.f32.xlu0 %v776
    %v788 = vpop.xlane.xlu0 %787
    %789 = vadd.xlane.f32.xlu0 %v777
    %v790 = vpop.xlane.xlu0 %789
    %791 = vadd.xlane.f32.xlu0 %v778
    %v792 = vpop.xlane.xlu0 %791
    %v793 = vmul.f32 %v786, 0.0078125
    %v794 = vmul.f32 %v788, 0.0078125
    %v795 = vmul.f32 %v790, 0.0078125
    %v796 = vmul.f32 %v792, 0.0078125
    %v797 = vmul.f32 %v775, %v775
    %v798 = vmul.f32 %v776, %v776
    %v799 = vmul.f32 %v777, %v777
    %v800 = vmul.f32 %v778, %v778
    %801 = vadd.xlane.f32.xlu0 %v797
    %v802 = vpop.xlane.xlu0 %801
    %803 = vadd.xlane.f32.xlu0 %v798
    %v804 = vpop.xlane.xlu0 %803
    %805 = vadd.xlane.f32.xlu0 %v799
    %v806 = vpop.xlane.xlu0 %805
    %807 = vadd.xlane.f32.xlu0 %v800
    %v808 = vpop.xlane.xlu0 %807
    %v809 = vmul.f32 %v802, 0.0078125
    %v810 = vmul.f32 %v804, 0.0078125
    %v811 = vmul.f32 %v806, 0.0078125
    %v812 = vmul.f32 %v808, 0.0078125
    %v813 = vmul.f32 %v793, %v793
    %v814 = vmul.f32 %v794, %v794
    %v815 = vmul.f32 %v795, %v795
    %v816 = vmul.f32 %v796, %v796
    %v817 = vsub.f32 %v809, %v813
    %v818 = vsub.f32 %v810, %v814
    %v819 = vsub.f32 %v811, %v815
    %v820 = vsub.f32 %v812, %v816
    %v821 = vsub.f32 %v775, %v793
    %v822 = vsub.f32 %v776, %v794
    %v823 = vsub.f32 %v777, %v795
    %v824 = vsub.f32 %v778, %v796
    %v825 = vadd.f32 %v817, 1e-05
    %v826 = vadd.f32 %v818, 1e-05
    %v827 = vadd.f32 %v819, 1e-05
    %v828 = vadd.f32 %v820, 1e-05
    %v829 = vrsqrt.pop %v825
    %v830 = vrsqrt.pop %v826
    %v831 = vrsqrt.pop %v827
    %v832 = vrsqrt.pop %v828
    %v833 = vmul.f32 %v821, %v829
    %v834 = vmul.f32 %v822, %v830
    %v835 = vmul.f32 %v823, %v831
    %v836 = vmul.f32 %v824, %v832
    %vm837 = vcmp.ge.f32.partialorder %v833, 0.0
    %vm838 = vcmp.ge.f32.partialorder %v834, 0.0
    %vm839 = vcmp.ge.f32.partialorder %v835, 0.0
    %vm840 = vcmp.ge.f32.partialorder %v836, 0.0
    %v841 = vmul.f32 %v833, 0.2
    %v842 = vmul.f32 %v834, 0.2
    %v843 = vmul.f32 %v835, 0.2
    %v844 = vmul.f32 %v836, 0.2
    %v845 = vsel %vm837, %v833, %v841
    %v846 = vsel %vm838, %v834, %v842
    %v847 = vsel %vm839, %v835, %v843
    %v848 = vsel %vm840, %v836, %v844
    %vm849 = vcmask 261120
    %v851 = vsel %vm849, %v779, 0
    %v854 = vsel %vm849, %v780, 0
    %v857 = vsel %vm849, %v781, 0
    %v860 = vsel %vm849, %v782, 0
    %862 = vmatprep.subr.mxu0 0.0
    %863 = vmatpush1.msra.mxu0 0.0
    %864 = vmatprep.subr.mxu0 0.0
    %865 = vmatpush1.msra.mxu0 0.0
    %866 = vmatprep.subr.mxu0 0.0
    %867 = vmatpush1.msra.mxu0 0.0
    %868 = vmatprep.subr.mxu0 0.0
    %869 = vmatpush1.msra.mxu0 0.0
    %870 = vmatprep.subr.mxu0 0.0
    %871 = vmatpush1.msra.mxu0 0.0
    %872 = vmatprep.subr.mxu0 0.0
    %873 = vmatpush1.msra.mxu0 0.0
    %874 = vmatprep.subr.mxu0 0.0
    %875 = vmatpush1.msra.mxu0 0.0
    %876 = vmatprep.subr.mxu0 0.0
    %877 = vmatpush1.msra.mxu0 0.0
    %878 = vmatprep.subr.mxu0 0.0
    %879 = vmatpush1.msra.mxu0 0.0
    %880 = vmatprep.subr.mxu0 0.0
    %881 = vmatpush1.msra.mxu0 0.0
    %882 = vmatprep.subr.mxu0 0.0
    %883 = vmatpush1.msra.mxu0 0.0
    %884 = vmatprep.subr.mxu0 0.0
    %885 = vmatpush1.msra.mxu0 0.0
    %886 = vmatprep.subr.mxu0 0.0
    %887 = vmatpush1.msra.mxu0 %v848
    %888 = vmatprep.subr.mxu0 0.0
    %889 = vmatpush1.msra.mxu0 %v847
    %890 = vmatprep.subr.mxu0 0.0
    %891 = vmatpush1.msra.mxu0 %v846
    %892 = vmatprep.subr.mxu0 0.0
    %893 = vmatpush1.msra.mxu0 %v845
    %894 = vmatprep.subr.mxu0 0.0
    %895 = vmatpush2.msra.mxu0 0.0
    %896 = vmatprep.subr.mxu0 0.0
    %897 = vmatpush2.msra.mxu0 0.0
    %898 = vmatprep.subr.mxu0 0.0
    %899 = vmatpush2.msra.mxu0 0.0
    %900 = vmatprep.subr.mxu0 0.0
    %901 = vmatpush2.msra.mxu0 0.0
    %902 = vmatprep.subr.mxu0 0.0
    %903 = vmatpush2.msra.mxu0 0.0
    %904 = vmatprep.subr.mxu0 0.0
    %905 = vmatpush2.msra.mxu0 0.0
    %906 = vmatprep.subr.mxu0 0.0
    %907 = vmatpush2.msra.mxu0 0.0
    %908 = vmatprep.subr.mxu0 0.0
    %909 = vmatpush2.msra.mxu0 0.0
    %910 = vmatprep.subr.mxu0 0.0
    %911 = vmatpush2.msra.mxu0 0.0
    %912 = vmatprep.subr.mxu0 0.0
    %913 = vmatpush2.msra.mxu0 0.0
    %914 = vmatprep.subr.mxu0 0.0
    %915 = vmatpush2.msra.mxu0 0.0
    %916 = vmatprep.subr.mxu0 0.0
    %917 = vmatpush2.msra.mxu0 0.0
    %918 = vmatprep.subr.mxu0 0.0
    %919 = vmatpush2.msra.mxu0 0.0
    %920 = vmatprep.subr.mxu0 0.0
    %921 = vmatpush2.msra.mxu0 0.0
    %922 = vmatprep.subr.mxu0 0.0
    %923 = vmatpush2.msra.mxu0 0.0
    %924 = vmatprep.subr.mxu0 0.0
    %925 = vmatpush2.msra.mxu0 0.0
    %926 = vmatprep.mubr.f32.mxu0 0.0
    %927 = vmatmul.mubr.f32.gmra.mxu0 %v851
    %v928 = vpop.f32.mrf.mxu0
    %v929 = vadd.f32 0.0, %v928
    %v930 = vpop.f32.mrf.mxu0
    %931 = vmatprep.mubr.f32.mxu0 0.0
    %932 = vmatmul.mubr.f32.gmra.mxu0 %v854
    %v933 = vpop.f32.mrf.mxu0
    %v934 = vadd.f32 0.0, %v933
    %v935 = vpop.f32.mrf.mxu0
    %936 = vmatprep.mubr.f32.mxu0 0.0
    %937 = vmatmul.mubr.f32.gmra.mxu0 %v857
    %v938 = vpop.f32.mrf.mxu0
    %v939 = vadd.f32 0.0, %v938
    %v940 = vpop.f32.mrf.mxu0
    %941 = vmatprep.mubr.f32.mxu0 0.0
    %942 = vmatmul.mubr.f32.gmra.mxu0 %v860
    %v943 = vpop.f32.mrf.mxu0
    %v944 = vadd.f32 0.0, %v943
    %v945 = vpop.f32.mrf.mxu0
    %946 = vdwg.mxu0
    %947 = vmatprep.subr.mxu0 %v202
    %948 = vmatpush1.msra.mxu0 %v201
    %949 = vmatprep.subr.mxu0 %v199
    %950 = vmatpush1.msra.mxu0 %v198
    %951 = vmatprep.subr.mxu0 %v196
    %952 = vmatpush1.msra.mxu0 %v195
    %953 = vmatprep.subr.mxu0 %v193
    %954 = vmatpush1.msra.mxu0 %v192
    %955 = vmatprep.subr.mxu0 %v190
    %956 = vmatpush1.msra.mxu0 %v189
    %957 = vmatprep.subr.mxu0 %v187
    %958 = vmatpush1.msra.mxu0 %v186
    %959 = vmatprep.subr.mxu0 %v184
    %960 = vmatpush1.msra.mxu0 %v183
    %961 = vmatprep.subr.mxu0 %v181
    %962 = vmatpush1.msra.mxu0 %v180
    %963 = vmatprep.subr.mxu0 %v178
    %964 = vmatpush1.msra.mxu0 %v177
    %965 = vmatprep.subr.mxu0 %v175
    %966 = vmatpush1.msra.mxu0 %v174
    %967 = vmatprep.subr.mxu0 %v172
    %968 = vmatpush1.msra.mxu0 %v171
    %969 = vmatprep.subr.mxu0 %v169
    %970 = vmatpush1.msra.mxu0 %v168
    %971 = vmatprep.subr.mxu0 %v166
    %972 = vmatpush1.msra.mxu0 %v165
    %973 = vmatprep.subr.mxu0 %v163
    %974 = vmatpush1.msra.mxu0 %v162
    %975 = vmatprep.subr.mxu0 %v160
    %976 = vmatpush1.msra.mxu0 %v159
    %977 = vmatprep.subr.mxu0 %v157
    %978 = vmatpush1.msra.mxu0 %v156
    %979 = vmatprep.subr.mxu0 0.0
    %980 = vmatpush2.msra.mxu0 0.0
    %981 = vmatprep.subr.mxu0 0.0
    %982 = vmatpush2.msra.mxu0 0.0
    %983 = vmatprep.subr.mxu0 0.0
    %984 = vmatpush2.msra.mxu0 0.0
    %985 = vmatprep.subr.mxu0 0.0
    %986 = vmatpush2.msra.mxu0 0.0
    %987 = vmatprep.subr.mxu0 0.0
    %988 = vmatpush2.msra.mxu0 0.0
    %989 = vmatprep.subr.mxu0 0.0
    %990 = vmatpush2.msra.mxu0 0.0
    %991 = vmatprep.subr.mxu0 0.0
    %992 = vmatpush2.msra.mxu0 0.0
    %993 = vmatprep.subr.mxu0 0.0
    %994 = vmatpush2.msra.mxu0 0.0
    %995 = vmatprep.subr.mxu0 0.0
    %996 = vmatpush2.msra.mxu0 0.0
    %997 = vmatprep.subr.mxu0 0.0
    %998 = vmatpush2.msra.mxu0 0.0
    %999 = vmatprep.subr.mxu0 0.0
    %1000 = vmatpush2.msra.mxu0 0.0
    %1001 = vmatprep.subr.mxu0 0.0
    %1002 = vmatpush2.msra.mxu0 0.0
    %1003 = vmatprep.subr.mxu0 0.0
    %1004 = vmatpush2.msra.mxu0 0.0
    %1005 = vmatprep.subr.mxu0 0.0
    %1006 = vmatpush2.msra.mxu0 0.0
    %1007 = vmatprep.subr.mxu0 0.0
    %1008 = vmatpush2.msra.mxu0 0.0
    %1009 = vmatprep.subr.mxu0 0.0
    %1010 = vmatpush2.msra.mxu0 0.0
    %1011 = vmatprep.mubr.f32.mxu0 0.0
    %1012 = vmatmul.mubr.f32.gmra.mxu0 %v929
    %v1013 = vpop.f32.mrf.mxu0
    %v1014 = vadd.f32 0.0, %v1013
    %v1015 = vpop.f32.mrf.mxu0
    %v1016 = vadd.f32 0.0, %v1015
    %1017 = vmatprep.mubr.f32.mxu0 0.0
    %1018 = vmatmul.mubr.f32.gmra.mxu0 %v934
    %v1019 = vpop.f32.mrf.mxu0
    %v1020 = vadd.f32 0.0, %v1019
    %v1021 = vpop.f32.mrf.mxu0
    %v1022 = vadd.f32 0.0, %v1021
    %1023 = vdwg.mxu0
    %1024 = vmatprep.subr.mxu0 0.0
    %1025 = vmatpush1.msra.mxu0 %v203
    %1026 = vmatprep.subr.mxu0 0.0
    %1027 = vmatpush1.msra.mxu0 %v200
    %1028 = vmatprep.subr.mxu0 0.0
    %1029 = vmatpush1.msra.mxu0 %v197
    %1030 = vmatprep.subr.mxu0 0.0
    %1031 = vmatpush1.msra.mxu0 %v194
    %1032 = vmatprep.subr.mxu0 0.0
    %1033 = vmatpush1.msra.mxu0 %v191
    %1034 = vmatprep.subr.mxu0 0.0
    %1035 = vmatpush1.msra.mxu0 %v188
    %1036 = vmatprep.subr.mxu0 0.0
    %1037 = vmatpush1.msra.mxu0 %v185
    %1038 = vmatprep.subr.mxu0 0.0
    %1039 = vmatpush1.msra.mxu0 %v182
    %1040 = vmatprep.subr.mxu0 0.0
    %1041 = vmatpush1.msra.mxu0 %v179
    %1042 = vmatprep.subr.mxu0 0.0
    %1043 = vmatpush1.msra.mxu0 %v176
    %1044 = vmatprep.subr.mxu0 0.0
    %1045 = vmatpush1.msra.mxu0 %v173
    %1046 = vmatprep.subr.mxu0 0.0
    %1047 = vmatpush1.msra.mxu0 %v170
    %1048 = vmatprep.subr.mxu0 0.0
    %1049 = vmatpush1.msra.mxu0 %v167
    %1050 = vmatprep.subr.mxu0 0.0
    %1051 = vmatpush1.msra.mxu0 %v164
    %1052 = vmatprep.subr.mxu0 0.0
    %1053 = vmatpush1.msra.mxu0 %v161
    %1054 = vmatprep.subr.mxu0 0.0
    %1055 = vmatpush1.msra.mxu0 %v158
    %1056 = vmatprep.subr.mxu0 0.0
    %1057 = vmatpush2.msra.mxu0 0.0
    %1058 = vmatprep.subr.mxu0 0.0
    %1059 = vmatpush2.msra.mxu0 0.0
    %1060 = vmatprep.subr.mxu0 0.0
    %1061 = vmatpush2.msra.mxu0 0.0
    %1062 = vmatprep.subr.mxu0 0.0
    %1063 = vmatpush2.msra.mxu0 0.0
    %1064 = vmatprep.subr.mxu0 0.0
    %1065 = vmatpush2.msra.mxu0 0.0
    %1066 = vmatprep.subr.mxu0 0.0
    %1067 = vmatpush2.msra.mxu0 0.0
    %1068 = vmatprep.subr.mxu0 0.0
    %1069 = vmatpush2.msra.mxu0 0.0
    %1070 = vmatprep.subr.mxu0 0.0
    %1071 = vmatpush2.msra.mxu0 0.0
    %1072 = vmatprep.subr.mxu0 0.0
    %1073 = vmatpush2.msra.mxu0 0.0
    %1074 = vmatprep.subr.mxu0 0.0
    %1075 = vmatpush2.msra.mxu0 0.0
    %1076 = vmatprep.subr.mxu0 0.0
    %1077 = vmatpush2.msra.mxu0 0.0
    %1078 = vmatprep.subr.mxu0 0.0
    %1079 = vmatpush2.msra.mxu0 0.0
    %1080 = vmatprep.subr.mxu0 0.0
    %1081 = vmatpush2.msra.mxu0 0.0
    %1082 = vmatprep.subr.mxu0 0.0
    %1083 = vmatpush2.msra.mxu0 0.0
    %1084 = vmatprep.subr.mxu0 0.0
    %1085 = vmatpush2.msra.mxu0 0.0
    %1086 = vmatprep.subr.mxu0 0.0
    %1087 = vmatpush2.msra.mxu0 0.0
    %1088 = vmatprep.mubr.f32.mxu0 0.0
    %1089 = vmatmul.mubr.f32.gmra.mxu0 %v929
    %v1090 = vpop.f32.mrf.mxu0
    %v1091 = vadd.f32 0.0, %v1090
    %v1092 = vpop.f32.mrf.mxu0
    %1093 = vmatprep.mubr.f32.mxu0 0.0
    %1094 = vmatmul.mubr.f32.gmra.mxu0 %v934
    %v1095 = vpop.f32.mrf.mxu0
    %v1096 = vadd.f32 0.0, %v1095
    %v1097 = vpop.f32.mrf.mxu0
    %1098 = vdwg.mxu0
    %v1099 = vmax.f32 %v1014, %v1016
    %v1100 = vmax.f32 %v1020, %v1022
    %v1101 = vmax.f32 %v1099, %v1091
    %v1102 = vmax.f32 %v1100, %v1096
    %v1103 = vadd.f32 %v1101, %v939
    %v1104 = vadd.f32 %v1102, %v944
    %1106 = vset.pattern.permute.xlu0 0
    %1107 = vperm.xlu0 %1106, %v783
    %v1108 = vpop.permute.xlu0 %1107
    %1111 = vset.pattern.permute.xlu0 0
    %1112 = vperm.xlu0 %1111, %v784
    %v1113 = vpop.permute.xlu0 %1112
    %v1115 = vadd.f32 %v1103, %v1108
    %v1116 = vadd.f32 %v1104, %v1113
    %1117 = vst [vmem:[#allocation2] sm:$0xff] %v1115
    %1118 = vst [vmem:[#allocation2 + $0x8] sm:$0xff] %v1116
    // Predicated region
    $region34: #{tpu_custom_call.1} parent=1 // pred_check
      _
    $region35: #{tpu_custom_call.1} parent=1 // pred_check_branch
      %1120 = sbr.rel (0) target = $region37
    $region36: #{tpu_custom_call.1} parent=1 // pred_region
      %s1122 = ssub.s32 256, 256
      %1123 = vsyncadd [#allocation3], %s1122
      %s1124 = sshll.u32 [#allocation2], 4
      %s1125 = int_to_ptr.vmem [resolvable:$true] %s1124
      %1130 = dma.vmem_to_hbm [thread:$0]  %s1125, 256, %s8, [#allocation3], 128, 128, 8
    $region37: #{tpu_custom_call.1} parent=1 // pred_fallthru
      _
    // Predicated region
    $region38: #{tpu_custom_call.1} parent=1 // pred_check
      _
    $region39: #{tpu_custom_call.1} parent=1 // pred_check_branch
      %1132 = sbr.rel (0) target = $region41
    $region40: #{tpu_custom_call.1} parent=1 // pred_region
      %1133 = dma.done [#allocation3], 256
    $region41: #{tpu_custom_call.1} parent=1 // pred_fallthru
      _
    %1134 = vsyncpa [#allocation3], 1

</llo_original>
